<compile_context>
chip_gen: v5e
topology: v5e:2x2
jax: 0.10.0
libtpu: 0.0.40
codegen_flags: <defaults>
</compile_context>

<pallas_src>
import functools

import jax
import jax.numpy as jnp
from jax import lax
from jax.experimental import pallas as pl
from jax.experimental.pallas import tpu as pltpu


def _round_up(x, m):
    return (x + m - 1) // m * m


# ----------------------------- Pallas kernel ------------------------------ #

def _deconv3x3_kernel(x_ref, w_ref, b_ref, o_ref, *, tap_starts, l_out):
    """3x3 conv, stride 1, zero padding, on a flattened padded image.

    x_ref: (1, Ci, Lext)   extended flat padded input (one batch element)
    w_ref: (9, Co, Ci)     tap-major weight, w[t, co, ci]
    b_ref: (Co, 1)         bias (broadcast over the lane/spatial axis)
    o_ref: (1, Co, Lout)   flat output (interior extracted in the wrapper)
    """
    x = x_ref[0]                                       # (Ci, Lext)
    co = o_ref.shape[1]
    acc = jnp.zeros((co, l_out), dtype=jnp.float32)
    # 9 taps, statically unrolled: each tap is a contiguous lane slice of the
    # extended flat input (no reshape, no relayout of the accumulator).
    for t, start in enumerate(tap_starts):
        shifted = x[:, start:start + l_out]            # (Ci, Lout)
        acc = acc + jnp.dot(w_ref[t], shifted,
                            preferred_element_type=jnp.float32)
    acc = acc + b_ref[...]                             # (Co, 1) broadcast
    o_ref[0] = acc.astype(o_ref.dtype)


def deconv3x3_pallas(x_ext, w_taps, bias_col, tap_starts, l_out):
    n, ci, l_ext = x_ext.shape
    n_taps, co, _ = w_taps.shape
    kernel = functools.partial(
        _deconv3x3_kernel, tap_starts=tap_starts, l_out=l_out)
    return pl.pallas_call(
        kernel,
        out_shape=jax.ShapeDtypeStruct((n, co, l_out), jnp.float32),
        grid_spec=pltpu.PrefetchScalarGridSpec(
            num_scalar_prefetch=0,
            grid=(n,),
            in_specs=[
                pl.BlockSpec((1, ci, l_ext), lambda i: (i, 0, 0)),
                # constant index_maps -> weights/bias stay resident in VMEM
                pl.BlockSpec((n_taps, co, ci), lambda i: (0, 0, 0)),
                pl.BlockSpec((co, 1), lambda i: (0, 0)),
            ],
            out_specs=pl.BlockSpec((1, co, l_out), lambda i: (i, 0, 0)),
        ),
        compiler_params=pltpu.CompilerParams(
            dimension_semantics=("parallel",)),
    )(x_ext, w_taps, bias_col)


# ----------------- weight re-parameterization (plain JAX) ----------------- #
# All weights follow PyTorch layout (C_out, C_in, ...) until the very end.

def weight_cd(w):                       # w: (Co, Ci, 3, 3), theta = 1.0
    co, ci = w.shape[:2]
    wf = w.reshape(co, ci, 9)
    center = wf[:, :, 4] - wf.sum(axis=2)
    return wf.at[:, :, 4].set(center).reshape(co, ci, 3, 3)


def weight_hd(w1d):                     # w1d: (Co, Ci, 3)
    co, ci = w1d.shape[:2]
    wf = jnp.zeros((co, ci, 9), jnp.float32)
    wf = wf.at[:, :, jnp.array([0, 3, 6])].set(w1d)
    wf = wf.at[:, :, jnp.array([2, 5, 8])].set(-w1d)
    return wf.reshape(co, ci, 3, 3)


def weight_vd(w1d):                     # w1d: (Co, Ci, 3)
    co, ci = w1d.shape[:2]
    wf = jnp.zeros((co, ci, 9), jnp.float32)
    wf = wf.at[:, :, jnp.array([0, 1, 2])].set(w1d)
    wf = wf.at[:, :, jnp.array([6, 7, 8])].set(-w1d)
    return wf.reshape(co, ci, 3, 3)


def weight_ad(w, theta=1.0):            # w: (Co, Ci, 3, 3)
    co, ci = w.shape[:2]
    wf = w.reshape(co, ci, 9)
    perm = jnp.array([3, 0, 1, 6, 4, 2, 7, 8, 5])
    wf = wf - theta * wf[:, :, perm]
    return wf.reshape(co, ci, 3, 3)


def _fused_weight_bias(params):
    w = (weight_cd(params["w_cd"]) + weight_hd(params["w_hd"])
         + weight_vd(params["w_vd"]) + weight_ad(params["w_ad"])
         + params["w_std"])                            # (Co, Ci, 3, 3)
    b = (params["b_cd"] + params["b_hd"] + params["b_vd"]
         + params["b_ad"] + params["b_std"])           # (Co,)
    return w, b


# ------------------------------ DEConv wrapper ----------------------------- #

def deconv_forward(x_nchw, params):
    """x_nchw: (N, C, H, W) float32 -> (N, C, H, W) float32."""
    w, b = _fused_weight_bias(params)
    n, c, h, wdt = x_nchw.shape
    hp, wp = h + 2, wdt + 2

    margin = wp + 1                             # makes every tap offset >= 0
    l_out = _round_up((h + 1) * wp, 128)        # lane-dense output length
    l_ext = _round_up(l_out + 2 * margin, 128)  # extended flat input length

    # Zero-pad spatial, flatten padded (Hp, Wp) grid onto the lane axis, and
    # add a zero margin in front (+ tail) so every tap is a forward slice.
    x_pad = jnp.pad(x_nchw, ((0, 0), (0, 0), (1, 1), (1, 1)))   # (N,C,Hp,Wp)
    flat = x_pad.reshape(n, c, hp * wp)
    x_ext = jnp.pad(flat, ((0, 0), (0, 0),
                           (margin, l_ext - margin - hp * wp)))

    # (Co, Ci, ky, kx) -> (9, Co, Ci) tap-major for per-tap (Co,Ci)@(Ci,L).
    w_taps = jnp.transpose(w, (2, 3, 0, 1)).reshape(9, c, c)
    bias_col = b.reshape(c, 1)

    # Flat offset of tap (ky, kx) relative to the output position, shifted by
    # the margin so all starts are non-negative static slice offsets.
    tap_starts = tuple(margin + (ky - 1) * wp + (kx - 1)
                       for ky in range(3) for kx in range(3))

    out_flat = deconv3x3_pallas(x_ext, w_taps, bias_col, tap_starts, l_out)

    # Flat output position o corresponds to padded coordinate (y, x) with
    # o = y*Wp + x; extract the interior rows/cols -> NCHW directly.
    out_rows = out_flat[:, :, :(h + 1) * wp].reshape(n, c, h + 1, wp)
    return out_rows[:, :, 1:, 1:wdt + 1]


def deconv_reference(x_nchw, params):
    """Pure-JAX reference (lax conv) for correctness check."""
    w, b = _fused_weight_bias(params)
    out = lax.conv_general_dilated(
        x_nchw, w, window_strides=(1, 1), padding=((1, 1), (1, 1)),
        dimension_numbers=("NCHW", "OIHW", "NCHW"))
    return out + b.reshape(1, -1, 1, 1)


# --------------------------------- main ------------------------------------ #

if __name__ == "__main__":
    key = jax.random.PRNGKey(0)
    dim = 4                      # channels
    N, H, W = 2, 16, 16

    ks = jax.random.split(key, 11)
    scale = 0.1
    params = {
        "w_cd":  scale * jax.random.normal(ks[0], (dim, dim, 3, 3), jnp.float32),
        "b_cd":  scale * jax.random.normal(ks[1], (dim,), jnp.float32),
        "w_hd":  scale * jax.random.normal(ks[2], (dim, dim, 3), jnp.float32),
        "b_hd":  scale * jax.random.normal(ks[3], (dim,), jnp.float32),
        "w_vd":  scale * jax.random.normal(ks[4], (dim, dim, 3), jnp.float32),
        "b_vd":  scale * jax.random.normal(ks[5], (dim,), jnp.float32),
        "w_ad":  scale * jax.random.normal(ks[6], (dim, dim, 3, 3), jnp.float32),
        "b_ad":  scale * jax.random.normal(ks[7], (dim,), jnp.float32),
        "w_std": scale * jax.random.normal(ks[8], (dim, dim, 3, 3), jnp.float32),
        "b_std": scale * jax.random.normal(ks[9], (dim,), jnp.float32),
    }
    x = jax.random.normal(ks[10], (N, dim, H, W), jnp.float32)

    out = jax.block_until_ready(deconv_forward(x, params))
    ref = jax.block_until_ready(deconv_reference(x, params))

    assert out.shape == (N, dim, H, W), out.shape
    assert jnp.allclose(out, ref, atol=1e-4, rtol=1e-4), (
        float(jnp.max(jnp.abs(out - ref))))
    print("KERNEL_OK")
</pallas_src>

<mosaic_0001>
module attributes {stable_mosaic.version = 11 : i64} {
  func.func @_deconv3x3_kernel(%arg0: i32, %arg1: memref<1x4x512xf32, #tpu.memory_space<vmem>>, %arg2: memref<9x4x4xf32, #tpu.memory_space<vmem>>, %arg3: memref<4x1xf32, #tpu.memory_space<vmem>>, %arg4: memref<1x4x384xf32, #tpu.memory_space<vmem>>) attributes {dimension_semantics = [#tpu.dimension_semantics<parallel>], iteration_bounds = array<i64: 2>, scalar_prefetch = 0 : i64, scratch_operands = 0 : i64, tpu.core_type = #tpu.core_type<tc>, window_params = [{transform_indices = @transform_0, window_bounds = array<i64: 1, 4, 512>}, {pipeline_mode = #tpu.pipeline_mode<synchronous>, transform_indices = @transform_1, window_bounds = array<i64: 9, 4, 4>}, {pipeline_mode = #tpu.pipeline_mode<synchronous>, transform_indices = @transform_2, window_bounds = array<i64: 4, 1>}, {transform_indices = @transform_3, window_bounds = array<i64: 1, 4, 384>}]} {
    %c0 = arith.constant 0 : index
    %c0_0 = arith.constant 0 : index
    %c0_1 = arith.constant 0 : index
    %0 = vector.load %arg1[%c0, %c0_0, %c0_1] : memref<1x4x512xf32, #tpu.memory_space<vmem>>, vector<1x4x512xf32>
    %1 = vector.shape_cast %0 : vector<1x4x512xf32> to vector<4x512xf32>
    %cst = arith.constant 0.000000e+00 : f32
    %2 = vector.broadcast %cst : f32 to vector<4x384xf32>
    %3 = vector.extract_strided_slice %1 {offsets = [0, 0], sizes = [4, 384], strides = [1, 1]} : vector<4x512xf32> to vector<4x384xf32>
    %c0_2 = arith.constant 0 : index
    %c0_3 = arith.constant 0 : index
    %c0_4 = arith.constant 0 : index
    %4 = vector.load %arg2[%c0_2, %c0_3, %c0_4] : memref<9x4x4xf32, #tpu.memory_space<vmem>>, vector<1x4x4xf32>
    %5 = vector.shape_cast %4 : vector<1x4x4xf32> to vector<4x4xf32>
    %cst_5 = arith.constant dense<0.000000e+00> : vector<4x384xf32>
    %6 = tpu.matmul %5, %3, %cst_5 {dimension_numbers = #tpu.dot_dimension_numbers<[1], [0], [0], [1], [0, 0, 1, 1], [], []>} : vector<4x4xf32>, vector<4x384xf32>, vector<4x384xf32> -> vector<4x384xf32>
    %7 = arith.addf %2, %6 : vector<4x384xf32>
    %8 = vector.extract_strided_slice %1 {offsets = [0, 1], sizes = [4, 384], strides = [1, 1]} : vector<4x512xf32> to vector<4x384xf32>
    %c1 = arith.constant 1 : index
    %c0_6 = arith.constant 0 : index
    %c0_7 = arith.constant 0 : index
    %9 = vector.load %arg2[%c1, %c0_6, %c0_7] : memref<9x4x4xf32, #tpu.memory_space<vmem>>, vector<1x4x4xf32>
    %10 = vector.shape_cast %9 : vector<1x4x4xf32> to vector<4x4xf32>
    %cst_8 = arith.constant dense<0.000000e+00> : vector<4x384xf32>
    %11 = tpu.matmul %10, %8, %cst_8 {dimension_numbers = #tpu.dot_dimension_numbers<[1], [0], [0], [1], [0, 0, 1, 1], [], []>} : vector<4x4xf32>, vector<4x384xf32>, vector<4x384xf32> -> vector<4x384xf32>
    %12 = arith.addf %7, %11 : vector<4x384xf32>
    %13 = vector.extract_strided_slice %1 {offsets = [0, 2], sizes = [4, 384], strides = [1, 1]} : vector<4x512xf32> to vector<4x384xf32>
    %c2 = arith.constant 2 : index
    %c0_9 = arith.constant 0 : index
    %c0_10 = arith.constant 0 : index
    %14 = vector.load %arg2[%c2, %c0_9, %c0_10] : memref<9x4x4xf32, #tpu.memory_space<vmem>>, vector<1x4x4xf32>
    %15 = vector.shape_cast %14 : vector<1x4x4xf32> to vector<4x4xf32>
    %cst_11 = arith.constant dense<0.000000e+00> : vector<4x384xf32>
    %16 = tpu.matmul %15, %13, %cst_11 {dimension_numbers = #tpu.dot_dimension_numbers<[1], [0], [0], [1], [0, 0, 1, 1], [], []>} : vector<4x4xf32>, vector<4x384xf32>, vector<4x384xf32> -> vector<4x384xf32>
    %17 = arith.addf %12, %16 : vector<4x384xf32>
    %18 = vector.extract_strided_slice %1 {offsets = [0, 18], sizes = [4, 384], strides = [1, 1]} : vector<4x512xf32> to vector<4x384xf32>
    %c3 = arith.constant 3 : index
    %c0_12 = arith.constant 0 : index
    %c0_13 = arith.constant 0 : index
    %19 = vector.load %arg2[%c3, %c0_12, %c0_13] : memref<9x4x4xf32, #tpu.memory_space<vmem>>, vector<1x4x4xf32>
    %20 = vector.shape_cast %19 : vector<1x4x4xf32> to vector<4x4xf32>
    %cst_14 = arith.constant dense<0.000000e+00> : vector<4x384xf32>
    %21 = tpu.matmul %20, %18, %cst_14 {dimension_numbers = #tpu.dot_dimension_numbers<[1], [0], [0], [1], [0, 0, 1, 1], [], []>} : vector<4x4xf32>, vector<4x384xf32>, vector<4x384xf32> -> vector<4x384xf32>
    %22 = arith.addf %17, %21 : vector<4x384xf32>
    %23 = vector.extract_strided_slice %1 {offsets = [0, 19], sizes = [4, 384], strides = [1, 1]} : vector<4x512xf32> to vector<4x384xf32>
    %c4 = arith.constant 4 : index
    %c0_15 = arith.constant 0 : index
    %c0_16 = arith.constant 0 : index
    %24 = vector.load %arg2[%c4, %c0_15, %c0_16] : memref<9x4x4xf32, #tpu.memory_space<vmem>>, vector<1x4x4xf32>
    %25 = vector.shape_cast %24 : vector<1x4x4xf32> to vector<4x4xf32>
    %cst_17 = arith.constant dense<0.000000e+00> : vector<4x384xf32>
    %26 = tpu.matmul %25, %23, %cst_17 {dimension_numbers = #tpu.dot_dimension_numbers<[1], [0], [0], [1], [0, 0, 1, 1], [], []>} : vector<4x4xf32>, vector<4x384xf32>, vector<4x384xf32> -> vector<4x384xf32>
    %27 = arith.addf %22, %26 : vector<4x384xf32>
    %28 = vector.extract_strided_slice %1 {offsets = [0, 20], sizes = [4, 384], strides = [1, 1]} : vector<4x512xf32> to vector<4x384xf32>
    %c5 = arith.constant 5 : index
    %c0_18 = arith.constant 0 : index
    %c0_19 = arith.constant 0 : index
    %29 = vector.load %arg2[%c5, %c0_18, %c0_19] : memref<9x4x4xf32, #tpu.memory_space<vmem>>, vector<1x4x4xf32>
    %30 = vector.shape_cast %29 : vector<1x4x4xf32> to vector<4x4xf32>
    %cst_20 = arith.constant dense<0.000000e+00> : vector<4x384xf32>
    %31 = tpu.matmul %30, %28, %cst_20 {dimension_numbers = #tpu.dot_dimension_numbers<[1], [0], [0], [1], [0, 0, 1, 1], [], []>} : vector<4x4xf32>, vector<4x384xf32>, vector<4x384xf32> -> vector<4x384xf32>
    %32 = arith.addf %27, %31 : vector<4x384xf32>
    %33 = vector.extract_strided_slice %1 {offsets = [0, 36], sizes = [4, 384], strides = [1, 1]} : vector<4x512xf32> to vector<4x384xf32>
    %c6 = arith.constant 6 : index
    %c0_21 = arith.constant 0 : index
    %c0_22 = arith.constant 0 : index
    %34 = vector.load %arg2[%c6, %c0_21, %c0_22] : memref<9x4x4xf32, #tpu.memory_space<vmem>>, vector<1x4x4xf32>
    %35 = vector.shape_cast %34 : vector<1x4x4xf32> to vector<4x4xf32>
    %cst_23 = arith.constant dense<0.000000e+00> : vector<4x384xf32>
    %36 = tpu.matmul %35, %33, %cst_23 {dimension_numbers = #tpu.dot_dimension_numbers<[1], [0], [0], [1], [0, 0, 1, 1], [], []>} : vector<4x4xf32>, vector<4x384xf32>, vector<4x384xf32> -> vector<4x384xf32>
    %37 = arith.addf %32, %36 : vector<4x384xf32>
    %38 = vector.extract_strided_slice %1 {offsets = [0, 37], sizes = [4, 384], strides = [1, 1]} : vector<4x512xf32> to vector<4x384xf32>
    %c7 = arith.constant 7 : index
    %c0_24 = arith.constant 0 : index
    %c0_25 = arith.constant 0 : index
    %39 = vector.load %arg2[%c7, %c0_24, %c0_25] : memref<9x4x4xf32, #tpu.memory_space<vmem>>, vector<1x4x4xf32>
    %40 = vector.shape_cast %39 : vector<1x4x4xf32> to vector<4x4xf32>
    %cst_26 = arith.constant dense<0.000000e+00> : vector<4x384xf32>
    %41 = tpu.matmul %40, %38, %cst_26 {dimension_numbers = #tpu.dot_dimension_numbers<[1], [0], [0], [1], [0, 0, 1, 1], [], []>} : vector<4x4xf32>, vector<4x384xf32>, vector<4x384xf32> -> vector<4x384xf32>
    %42 = arith.addf %37, %41 : vector<4x384xf32>
    %43 = vector.extract_strided_slice %1 {offsets = [0, 38], sizes = [4, 384], strides = [1, 1]} : vector<4x512xf32> to vector<4x384xf32>
    %c8 = arith.constant 8 : index
    %c0_27 = arith.constant 0 : index
    %c0_28 = arith.constant 0 : index
    %44 = vector.load %arg2[%c8, %c0_27, %c0_28] : memref<9x4x4xf32, #tpu.memory_space<vmem>>, vector<1x4x4xf32>
    %45 = vector.shape_cast %44 : vector<1x4x4xf32> to vector<4x4xf32>
    %cst_29 = arith.constant dense<0.000000e+00> : vector<4x384xf32>
    %46 = tpu.matmul %45, %43, %cst_29 {dimension_numbers = #tpu.dot_dimension_numbers<[1], [0], [0], [1], [0, 0, 1, 1], [], []>} : vector<4x4xf32>, vector<4x384xf32>, vector<4x384xf32> -> vector<4x384xf32>
    %47 = arith.addf %42, %46 : vector<4x384xf32>
    %c0_30 = arith.constant 0 : index
    %c0_31 = arith.constant 0 : index
    %48 = vector.load %arg3[%c0_30, %c0_31] : memref<4x1xf32, #tpu.memory_space<vmem>>, vector<4x1xf32>
    %49 = vector.broadcast %48 : vector<4x1xf32> to vector<4x384xf32>
    %50 = arith.addf %47, %49 : vector<4x384xf32>
    %c0_32 = arith.constant 0 : index
    %c0_33 = arith.constant 0 : index
    %c0_34 = arith.constant 0 : index
    %51 = vector.load %arg4[%c0_32, %c0_33, %c0_34] : memref<1x4x384xf32, #tpu.memory_space<vmem>>, vector<1x4x384xf32>
    %52 = vector.shape_cast %51 : vector<1x4x384xf32> to vector<4x384xf32>
    %53 = vector.shape_cast %50 : vector<4x384xf32> to vector<1x4x384xf32>
    tpu.vector_store %arg4[%c0_32, %c0_33, %c0_34], %53 {strides = array<i32>} : memref<1x4x384xf32, #tpu.memory_space<vmem>>, vector<1x4x384xf32>,
    return
  }
  func.func @transform_0(%arg0: i32) -> (i32, i32, i32) {
    %c0_i32 = arith.constant 0 : i32
    %c0_i32_0 = arith.constant 0 : i32
    %c0_i32_1 = arith.constant 0 : i32
    return %arg0, %c0_i32, %c0_i32_0 : i32, i32, i32
  }
  func.func @transform_1(%arg0: i32) -> (i32, i32, i32) {
    %c0_i32 = arith.constant 0 : i32
    %c0_i32_0 = arith.constant 0 : i32
    %c0_i32_1 = arith.constant 0 : i32
    %c0_i32_2 = arith.constant 0 : i32
    return %c0_i32, %c0_i32_0, %c0_i32_1 : i32, i32, i32
  }
  func.func @transform_2(%arg0: i32) -> (i32, i32) {
    %c0_i32 = arith.constant 0 : i32
    %c0_i32_0 = arith.constant 0 : i32
    %c0_i32_1 = arith.constant 0 : i32
    return %c0_i32, %c0_i32_0 : i32, i32
  }
  func.func @transform_3(%arg0: i32) -> (i32, i32, i32) {
    %c0_i32 = arith.constant 0 : i32
    %c0_i32_0 = arith.constant 0 : i32
    %c0_i32_1 = arith.constant 0 : i32
    return %arg0, %c0_i32, %c0_i32_0 : i32, i32, i32
  }
}

</mosaic_0001>

<llo_original>
// kernel: tpu_custom_call.1
$region0: #{tpu_custom_call.1}
  #allocation0 [shape = 'u32[]', space=smem, size = 0x4, offset = 0x4, fixed_abs, tag = 'smem constant byte address 0x4 - core index']
  #allocation1 [shape = 'u32[72,128]{1,0:T(1,128)}', space=vmem, size = 0x9000, scoped, tag = 'internal scratch']
  %s0 = inlined_call_operand.vmem [shape: f32[2,4,512], index: 0, kind: input, shape index: {}]
  %s1 = inlined_call_operand.vmem [shape: f32[9,4,4], index: 1, kind: input, shape index: {}]
  %s2 = inlined_call_operand.vmem [shape: f32[4,1], index: 2, kind: input, shape index: {}]
  %s3 = inlined_call_operand.hbm [shape: f32[2,4,384], index: 3, kind: output, shape index: {}]
  %s4 = sld [smem:[#allocation0]]
  $region45: #{tpu_custom_call.1} parent=0
    _
  %s6 = ssub.s32 1, %s4
  %s7 = scalar_select 0, %s6, %s4
  $region1: #{tpu_custom_call.1} parent=0
    #allocation2 [shape = 'u8[12288]{0}', space=vmem, size = 0x3000, scoped, tag = 'output window, operand 0']
    #allocation3 [shape = 's32[2]{0}', space=sflag, size = 0x8, scoped, tag = 'scoped memory for tpu_custom_call.1']
    %8 = vsyncpa [#allocation3], 0
    %s9 = scalar_lea.sflag [#allocation3], 1
    %10 = vsyncpa %s9, 0
    loop: start=0, step=1, limit=4
    $region2: #{tpu_custom_call.1} parent=1 // loop_pre_header
      _
    $region3: #{tpu_custom_call.1} parent=1 // loop_header
      %s12 = sphi 0, %s16
      %p13 = scmp.ge.s32.totalorder %s12, 4
      %s22 = sphi 0, %s24
      %s25 = sphi 0, %s22
      %s26 = sphi 0, %s25
      %s42 = sphi 0, %s26
      %s46 = sphi 0, %s46
      %s48 = sphi 0, %s46
      %s49 = sphi 0, %s48
      %s63 = sphi 0, %s49
      %s67 = sphi 0, %s67
      %s69 = sphi 0, %s67
      %s70 = sphi 0, %s69
      %s84 = sphi 0, %s70
      %s90 = sphi 0, %s92
      %s93 = sphi 0, %s90
      %s94 = sphi 0, %s93
      %s110 = sphi 0, %s94
    $region4: #{tpu_custom_call.1} parent=1 // loop_header_branch
      %15 = sbr.rel (%p13) target = $region8
    $region5: #{tpu_custom_call.1} parent=1 // loop_body
      %s17 = ssub.s32 %s12, 1
      %s18 = ssub.s32 %s12, 2
      %s19 = sadd.s32 %s12, 1
      %s20 = ssub.s32 %s12, %s19
      %p21 = scmp.eq.s32.totalorder %s20, 0
      %s23 = sadd.s32 %s22, 1
      %s24 = scalar_select %p21, %s22, %s23
      %p27 = pneg %p21
      %p28 = scmp.eq.s32.totalorder %s12, 1
      %p29 = por %p27, %p28
      %p30 = scmp.ne.s32.totalorder %s22, %s25
      %p31 = scmp.eq.s32.totalorder %s12, 0
      %p32 = por %p30, %p31
      %p33 = scmp.ne.s32.totalorder %s22, %s25
      %p34 = scmp.eq.s32.totalorder %s17, 1
      %p35 = por %p33, %p34
      %p36 = scmp.ne.s32.totalorder %s25, %s26
      %p37 = scmp.eq.s32.totalorder %s17, 0
      %p38 = por %p36, %p37
      %p39 = scmp.ne.s32.totalorder %s25, %s26
      %p40 = scmp.eq.s32.totalorder %s18, 1
      %p41 = por %p39, %p40
      %p43 = scmp.ne.s32.totalorder %s26, %s42
      %p44 = scmp.eq.s32.totalorder %s18, 0
      %p45 = por %p43, %p44
      %s47 = sadd.s32 %s46, 1
      %p50 = scmp.eq.s32.totalorder %s12, 1
      %p51 = scmp.ne.s32.totalorder %s46, %s48
      %p52 = scmp.eq.s32.totalorder %s12, 0
      %p53 = por %p51, %p52
      %p54 = scmp.ne.s32.totalorder %s46, %s48
      %p55 = scmp.eq.s32.totalorder %s17, 1
      %p56 = por %p54, %p55
      %p57 = scmp.ne.s32.totalorder %s48, %s49
      %p58 = scmp.eq.s32.totalorder %s17, 0
      %p59 = por %p57, %p58
      %p60 = scmp.ne.s32.totalorder %s48, %s49
      %p61 = scmp.eq.s32.totalorder %s18, 1
      %p62 = por %p60, %p61
      %p64 = scmp.ne.s32.totalorder %s49, %s63
      %p65 = scmp.eq.s32.totalorder %s18, 0
      %p66 = por %p64, %p65
      %s68 = sadd.s32 %s67, 1
      %p71 = scmp.eq.s32.totalorder %s12, 1
      %p72 = scmp.ne.s32.totalorder %s67, %s69
      %p73 = scmp.eq.s32.totalorder %s12, 0
      %p74 = por %p72, %p73
      %p75 = scmp.ne.s32.totalorder %s67, %s69
      %p76 = scmp.eq.s32.totalorder %s17, 1
      %p77 = por %p75, %p76
      %p78 = scmp.ne.s32.totalorder %s69, %s70
      %p79 = scmp.eq.s32.totalorder %s17, 0
      %p80 = por %p78, %p79
      %p81 = scmp.ne.s32.totalorder %s69, %s70
      %p82 = scmp.eq.s32.totalorder %s18, 1
      %p83 = por %p81, %p82
      %p85 = scmp.ne.s32.totalorder %s70, %s84
      %p86 = scmp.eq.s32.totalorder %s18, 0
      %p87 = por %p85, %p86
      %s88 = ssub.s32 %s12, %s19
      %p89 = scmp.eq.s32.totalorder %s88, 0
      %s91 = sadd.s32 %s90, 1
      %s92 = scalar_select %p89, %s90, %s91
      %p95 = pneg %p89
      %p96 = scmp.eq.s32.totalorder %s12, 1
      %p97 = por %p95, %p96
      %p98 = scmp.ne.s32.totalorder %s90, %s93
      %p99 = scmp.eq.s32.totalorder %s12, 0
      %p100 = por %p98, %p99
      %p101 = scmp.ne.s32.totalorder %s90, %s93
      %p102 = scmp.eq.s32.totalorder %s17, 1
      %p103 = por %p101, %p102
      %p104 = scmp.ne.s32.totalorder %s93, %s94
      %p105 = scmp.eq.s32.totalorder %s17, 0
      %p106 = por %p104, %p105
      %p107 = scmp.ne.s32.totalorder %s93, %s94
      %p108 = scmp.eq.s32.totalorder %s18, 1
      %p109 = por %p107, %p108
      %p111 = scmp.ne.s32.totalorder %s94, %s110
      %p112 = scmp.eq.s32.totalorder %s18, 0
      %p113 = por %p111, %p112
      %p114 = scmp.le.s32.totalorder 1, %s12
      %p115 = scmp.lt.s32.totalorder %s12, 3
      %p116 = pnand %p114, %p115
      %p117 = pneg %p116
      // Predicated region
      $region9: #{tpu_custom_call.1} parent=5 // pred_check
        _
      $region10: #{tpu_custom_call.1} parent=5 // pred_check_branch
        %119 = sbr.rel (%p116) target = $region12
      $region11: #{tpu_custom_call.1} parent=5 // pred_region
        %s120 = ssub.s32 %s12, 1
        // Predicated region
        $region13: #{tpu_custom_call.1} parent=11 // pred_check
          %p121 = pneg %p59
        $region14: #{tpu_custom_call.1} parent=11 // pred_check_branch
          %123 = sbr.rel (%p121) target = $region16
        $region15: #{tpu_custom_call.1} parent=11 // pred_region
          _
        $region16: #{tpu_custom_call.1} parent=11 // pred_fallthru
          _
        // Predicated region
        $region17: #{tpu_custom_call.1} parent=11 // pred_check
          %p124 = pneg %p80
        $region18: #{tpu_custom_call.1} parent=11 // pred_check_branch
          %126 = sbr.rel (%p124) target = $region20
        $region19: #{tpu_custom_call.1} parent=11 // pred_region
          _
        $region20: #{tpu_custom_call.1} parent=11 // pred_fallthru
          _
      $region12: #{tpu_custom_call.1} parent=5 // pred_fallthru
        _
      %p127 = scmp.lt.s32.totalorder %s12, 2
      // Predicated region
      $region21: #{tpu_custom_call.1} parent=5 // pred_check
        %p128 = pneg %p127
      $region22: #{tpu_custom_call.1} parent=5 // pred_check_branch
        %130 = sbr.rel (%p128) target = $region24
      $region23: #{tpu_custom_call.1} parent=5 // pred_region
        // Predicated region
        $region25: #{tpu_custom_call.1} parent=23 // pred_check
          %p131 = pneg %p32
        $region26: #{tpu_custom_call.1} parent=23 // pred_check_branch
          %133 = sbr.rel (%p131) target = $region28
        $region27: #{tpu_custom_call.1} parent=23 // pred_region
          %p134 = scmp.lt.s32.totalorder %s12, 1
          %s135 = scalar_select %p134, %s12, 1
          %s136 = smul.addr %s135, 4
          %s137 = smul.addr %s136, 4
          %s138 = scalar_lea.vmem %s0, %s137
        $region28: #{tpu_custom_call.1} parent=23 // pred_fallthru
          _
      $region24: #{tpu_custom_call.1} parent=5 // pred_fallthru
        _
      %p139 = scmp.le.s32.totalorder 1, %s12
      %p140 = scmp.lt.s32.totalorder %s12, 3
      %p141 = pnand %p139, %p140
      %p142 = pneg %p141
      // Predicated region
      $region29: #{tpu_custom_call.1} parent=5 // pred_check
        _
      $region30: #{tpu_custom_call.1} parent=5 // pred_check_branch
        %144 = sbr.rel (%p141) target = $region32
      $region31: #{tpu_custom_call.1} parent=5 // pred_region
        %s145 = ssub.s32 %s12, 1
        %p146 = scmp.lt.s32.totalorder %s17, 1
        %s147 = scalar_select %p146, %s17, 1
        %s148 = smul.addr %s147, 4
        %s149 = smul.addr %s148, 4
        %s150 = scalar_lea.vmem %s0, %s149
        %p151 = pneg %p38
        %p152 = pneg %p35
        %p153 = pneg %p59
        %p154 = pneg %p56
        %p155 = pneg %p80
        %p156 = pneg %p77
        %p157 = pneg %p106
        %p158 = pneg %p103
        %s159 = sand.u32 %s93, 1
        %s160 = scalar_lea.sflag [#allocation3], %s159
        %s161 = sand.u32 %s93, 1
        %s162 = smul.addr %s161, 12
        %s163 = scalar_lea.vmem [#allocation2], %s162
        %p164 = scmp.lt.s32.totalorder %s17, 1
        %s165 = scalar_select %p164, %s17, 1
        %s166 = smul.addr %s165, 4
        %s167 = smul.addr %s166, 4
        %s168 = scalar_lea.vmem %s0, %s167
        %v169 = vld [vmem:[%s168] sm:$0xff]
        %v170 = vld [vmem:[%s168 + $0x8] sm:$0xff]
        %v171 = vld [vmem:[%s1] sm:$0xf]
        %s172 = scalar_lea.vmem %s1, 4
        %v173 = vld [vmem:[%s172] sm:$0xf]
        %176 = vst [vmem:[#allocation1] ss:$2 sm:$0xff] %v169
        %s177 = scalar_lea.vmem [#allocation1], 16
        %178 = vst [vmem:[%s177] ss:$2 sm:$0xff] %v170
        %v179 = vld.sshfl [vmem:[#allocation1] sm:$0xff pattern:$0x75316420]
        %v180 = vld.sshfl [vmem:[#allocation1 + $0x8] sm:$0xff pattern:$0x75316420]
        %v181 = vld.sshfl [vmem:[#allocation1 + $0x10] sm:$0xff pattern:$0x75316420]
        %v182 = vld.sshfl [vmem:[#allocation1 + $0x18] sm:$0xff pattern:$0x75316420]
        %183 = vrot.lane.b32.xlu0 %v179, 127
        %v184 = vpop.permute.xlu0 %183
        %185 = vrot.lane.b32.xlu0 %v180, 127
        %v186 = vpop.permute.xlu0 %185
        %187 = vrot.lane.b32.xlu0 %v181, 127
        %v188 = vpop.permute.xlu0 %187
        %189 = vrot.lane.b32.xlu0 %v182, 127
        %v190 = vpop.permute.xlu0 %189
        %vm191 = vcmask 1039360
        %v192 = vsel %vm191, %v184, %v186
        %v193 = vsel %vm191, %v186, %v188
        %v194 = vsel %vm191, %v188, %v190
        %vm195 = vcmask 31744
        %v197 = vsel %vm195, %v173, 0
        %vm199 = vcmask 1043456
        %v200 = vsel %vm199, %v192, 0
        %v202 = vsel %vm199, %v193, 0
        %v204 = vsel %vm199, %v194, 0
        %206 = vmatpush.msra.mxu0 0.0
        %207 = vmatpush.msra.mxu0 0.0
        %208 = vmatpush.msra.mxu0 0.0
        %209 = vmatpush.msra.mxu0 0.0
        %210 = vmatpush.msra.mxu0 0.0
        %211 = vmatpush.msra.mxu0 0.0
        %212 = vmatpush.msra.mxu0 0.0
        %213 = vmatpush.msra.mxu0 0.0
        %214 = vmatpush.msra.mxu0 0.0
        %215 = vmatpush.msra.mxu0 0.0
        %216 = vmatpush.msra.mxu0 0.0
        %217 = vmatpush.msra.mxu0 0.0
        %218 = vmatpush.msra.mxu0 0.0
        %219 = vmatpush.msra.mxu0 0.0
        %220 = vmatpush.msra.mxu0 0.0
        %221 = vmatpush.msra.mxu0 %v200
        %222 = vmatmul.f32.gmra.mxu0 %v197
        %v223 = vpop.f32.mrf.mxu0
        %v224 = vadd.f32 0.0, %v223
        %225 = vdwg.mxu0
        %226 = vmatpush.msra.mxu0 0.0
        %227 = vmatpush.msra.mxu0 0.0
        %228 = vmatpush.msra.mxu0 0.0
        %229 = vmatpush.msra.mxu0 0.0
        %230 = vmatpush.msra.mxu0 0.0
        %231 = vmatpush.msra.mxu0 0.0
        %232 = vmatpush.msra.mxu0 0.0
        %233 = vmatpush.msra.mxu0 0.0
        %234 = vmatpush.msra.mxu0 0.0
        %235 = vmatpush.msra.mxu0 0.0
        %236 = vmatpush.msra.mxu0 0.0
        %237 = vmatpush.msra.mxu0 0.0
        %238 = vmatpush.msra.mxu0 0.0
        %239 = vmatpush.msra.mxu0 0.0
        %240 = vmatpush.msra.mxu0 0.0
        %241 = vmatpush.msra.mxu0 %v202
        %242 = vmatmul.f32.gmra.mxu0 %v197
        %v243 = vpop.f32.mrf.mxu0
        %v244 = vadd.f32 0.0, %v243
        %245 = vdwg.mxu0
        %246 = vmatpush.msra.mxu0 0.0
        %247 = vmatpush.msra.mxu0 0.0
        %248 = vmatpush.msra.mxu0 0.0
        %249 = vmatpush.msra.mxu0 0.0
        %250 = vmatpush.msra.mxu0 0.0
        %251 = vmatpush.msra.mxu0 0.0
        %252 = vmatpush.msra.mxu0 0.0
        %253 = vmatpush.msra.mxu0 0.0
        %254 = vmatpush.msra.mxu0 0.0
        %255 = vmatpush.msra.mxu0 0.0
        %256 = vmatpush.msra.mxu0 0.0
        %257 = vmatpush.msra.mxu0 0.0
        %258 = vmatpush.msra.mxu0 0.0
        %259 = vmatpush.msra.mxu0 0.0
        %260 = vmatpush.msra.mxu0 0.0
        %261 = vmatpush.msra.mxu0 %v204
        %262 = vmatmul.f32.gmra.mxu0 %v197
        %v263 = vpop.f32.mrf.mxu0
        %v264 = vadd.f32 0.0, %v263
        %265 = vdwg.mxu0
        %266 = vst [vmem:[#allocation1] ss:$2 sm:$0xff] %v169
        %s267 = scalar_lea.vmem [#allocation1], 16
        %268 = vst [vmem:[%s267] ss:$2 sm:$0xff] %v170
        %v269 = vld.sshfl [vmem:[#allocation1] sm:$0xff pattern:$0x75316420]
        %v270 = vld.sshfl [vmem:[#allocation1 + $0x8] sm:$0xff pattern:$0x75316420]
        %v271 = vld.sshfl [vmem:[#allocation1 + $0x10] sm:$0xff pattern:$0x75316420]
        %v273 = vsel %vm195, %v171, 0
        %v275 = vsel %vm199, %v269, 0
        %v277 = vsel %vm199, %v270, 0
        %v279 = vsel %vm199, %v271, 0
        %281 = vmatpush.msra.mxu0 0.0
        %282 = vmatpush.msra.mxu0 0.0
        %283 = vmatpush.msra.mxu0 0.0
        %284 = vmatpush.msra.mxu0 0.0
        %285 = vmatpush.msra.mxu0 0.0
        %286 = vmatpush.msra.mxu0 0.0
        %287 = vmatpush.msra.mxu0 0.0
        %288 = vmatpush.msra.mxu0 0.0
        %289 = vmatpush.msra.mxu0 0.0
        %290 = vmatpush.msra.mxu0 0.0
        %291 = vmatpush.msra.mxu0 0.0
        %292 = vmatpush.msra.mxu0 0.0
        %293 = vmatpush.msra.mxu0 0.0
        %294 = vmatpush.msra.mxu0 0.0
        %295 = vmatpush.msra.mxu0 0.0
        %296 = vmatpush.msra.mxu0 %v275
        %297 = vmatmul.f32.gmra.mxu0 %v273
        %v298 = vpop.f32.mrf.mxu0
        %v299 = vadd.f32 %v224, %v298
        %300 = vdwg.mxu0
        %301 = vmatpush.msra.mxu0 0.0
        %302 = vmatpush.msra.mxu0 0.0
        %303 = vmatpush.msra.mxu0 0.0
        %304 = vmatpush.msra.mxu0 0.0
        %305 = vmatpush.msra.mxu0 0.0
        %306 = vmatpush.msra.mxu0 0.0
        %307 = vmatpush.msra.mxu0 0.0
        %308 = vmatpush.msra.mxu0 0.0
        %309 = vmatpush.msra.mxu0 0.0
        %310 = vmatpush.msra.mxu0 0.0
        %311 = vmatpush.msra.mxu0 0.0
        %312 = vmatpush.msra.mxu0 0.0
        %313 = vmatpush.msra.mxu0 0.0
        %314 = vmatpush.msra.mxu0 0.0
        %315 = vmatpush.msra.mxu0 0.0
        %316 = vmatpush.msra.mxu0 %v277
        %317 = vmatmul.f32.gmra.mxu0 %v273
        %v318 = vpop.f32.mrf.mxu0
        %v319 = vadd.f32 %v244, %v318
        %320 = vdwg.mxu0
        %321 = vmatpush.msra.mxu0 0.0
        %322 = vmatpush.msra.mxu0 0.0
        %323 = vmatpush.msra.mxu0 0.0
        %324 = vmatpush.msra.mxu0 0.0
        %325 = vmatpush.msra.mxu0 0.0
        %326 = vmatpush.msra.mxu0 0.0
        %327 = vmatpush.msra.mxu0 0.0
        %328 = vmatpush.msra.mxu0 0.0
        %329 = vmatpush.msra.mxu0 0.0
        %330 = vmatpush.msra.mxu0 0.0
        %331 = vmatpush.msra.mxu0 0.0
        %332 = vmatpush.msra.mxu0 0.0
        %333 = vmatpush.msra.mxu0 0.0
        %334 = vmatpush.msra.mxu0 0.0
        %335 = vmatpush.msra.mxu0 0.0
        %336 = vmatpush.msra.mxu0 %v279
        %337 = vmatmul.f32.gmra.mxu0 %v273
        %v338 = vpop.f32.mrf.mxu0
        %v339 = vadd.f32 %v264, %v338
        %340 = vdwg.mxu0
        %s341 = scalar_lea.vmem %s1, 8
        %v342 = vld [vmem:[%s341] sm:$0xf]
        %343 = vst [vmem:[#allocation1] ss:$2 sm:$0xff] %v169
        %s344 = scalar_lea.vmem [#allocation1], 16
        %345 = vst [vmem:[%s344] ss:$2 sm:$0xff] %v170
        %v346 = vld.sshfl [vmem:[#allocation1] sm:$0xff pattern:$0x75316420]
        %v347 = vld.sshfl [vmem:[#allocation1 + $0x8] sm:$0xff pattern:$0x75316420]
        %v348 = vld.sshfl [vmem:[#allocation1 + $0x10] sm:$0xff pattern:$0x75316420]
        %v349 = vld.sshfl [vmem:[#allocation1 + $0x18] sm:$0xff pattern:$0x75316420]
        %350 = vrot.lane.b32.xlu0 %v346, 126
        %v351 = vpop.permute.xlu0 %350
        %352 = vrot.lane.b32.xlu0 %v347, 126
        %v353 = vpop.permute.xlu0 %352
        %354 = vrot.lane.b32.xlu0 %v348, 126
        %v355 = vpop.permute.xlu0 %354
        %356 = vrot.lane.b32.xlu0 %v349, 126
        %v357 = vpop.permute.xlu0 %356
        %vm358 = vcmask 1031168
        %v359 = vsel %vm358, %v351, %v353
        %v360 = vsel %vm358, %v353, %v355
        %v361 = vsel %vm358, %v355, %v357
        %v363 = vsel %vm195, %v342, 0
        %v365 = vsel %vm199, %v359, 0
        %v367 = vsel %vm199, %v360, 0
        %v369 = vsel %vm199, %v361, 0
        %371 = vmatpush.msra.mxu0 0.0
        %372 = vmatpush.msra.mxu0 0.0
        %373 = vmatpush.msra.mxu0 0.0
        %374 = vmatpush.msra.mxu0 0.0
        %375 = vmatpush.msra.mxu0 0.0
        %376 = vmatpush.msra.mxu0 0.0
        %377 = vmatpush.msra.mxu0 0.0
        %378 = vmatpush.msra.mxu0 0.0
        %379 = vmatpush.msra.mxu0 0.0
        %380 = vmatpush.msra.mxu0 0.0
        %381 = vmatpush.msra.mxu0 0.0
        %382 = vmatpush.msra.mxu0 0.0
        %383 = vmatpush.msra.mxu0 0.0
        %384 = vmatpush.msra.mxu0 0.0
        %385 = vmatpush.msra.mxu0 0.0
        %386 = vmatpush.msra.mxu0 %v365
        %387 = vmatmul.f32.gmra.mxu0 %v363
        %v388 = vpop.f32.mrf.mxu0
        %v389 = vadd.f32 0.0, %v388
        %390 = vdwg.mxu0
        %391 = vmatpush.msra.mxu0 0.0
        %392 = vmatpush.msra.mxu0 0.0
        %393 = vmatpush.msra.mxu0 0.0
        %394 = vmatpush.msra.mxu0 0.0
        %395 = vmatpush.msra.mxu0 0.0
        %396 = vmatpush.msra.mxu0 0.0
        %397 = vmatpush.msra.mxu0 0.0
        %398 = vmatpush.msra.mxu0 0.0
        %399 = vmatpush.msra.mxu0 0.0
        %400 = vmatpush.msra.mxu0 0.0
        %401 = vmatpush.msra.mxu0 0.0
        %402 = vmatpush.msra.mxu0 0.0
        %403 = vmatpush.msra.mxu0 0.0
        %404 = vmatpush.msra.mxu0 0.0
        %405 = vmatpush.msra.mxu0 0.0
        %406 = vmatpush.msra.mxu0 %v367
        %407 = vmatmul.f32.gmra.mxu0 %v363
        %v408 = vpop.f32.mrf.mxu0
        %v409 = vadd.f32 0.0, %v408
        %410 = vdwg.mxu0
        %411 = vmatpush.msra.mxu0 0.0
        %412 = vmatpush.msra.mxu0 0.0
        %413 = vmatpush.msra.mxu0 0.0
        %414 = vmatpush.msra.mxu0 0.0
        %415 = vmatpush.msra.mxu0 0.0
        %416 = vmatpush.msra.mxu0 0.0
        %417 = vmatpush.msra.mxu0 0.0
        %418 = vmatpush.msra.mxu0 0.0
        %419 = vmatpush.msra.mxu0 0.0
        %420 = vmatpush.msra.mxu0 0.0
        %421 = vmatpush.msra.mxu0 0.0
        %422 = vmatpush.msra.mxu0 0.0
        %423 = vmatpush.msra.mxu0 0.0
        %424 = vmatpush.msra.mxu0 0.0
        %425 = vmatpush.msra.mxu0 0.0
        %426 = vmatpush.msra.mxu0 %v369
        %427 = vmatmul.f32.gmra.mxu0 %v363
        %v428 = vpop.f32.mrf.mxu0
        %v429 = vadd.f32 0.0, %v428
        %430 = vdwg.mxu0
        %v431 = vadd.f32 %v299, %v389
        %v432 = vadd.f32 %v319, %v409
        %v433 = vadd.f32 %v339, %v429
        %s434 = scalar_lea.vmem %s1, 12
        %v435 = vld [vmem:[%s434] sm:$0xf]
        %436 = vst [vmem:[#allocation1] ss:$2 sm:$0xff] %v169
        %s437 = scalar_lea.vmem [#allocation1], 16
        %438 = vst [vmem:[%s437] ss:$2 sm:$0xff] %v170
        %v439 = vld.sshfl [vmem:[#allocation1] sm:$0xff pattern:$0x75316420]
        %v440 = vld.sshfl [vmem:[#allocation1 + $0x8] sm:$0xff pattern:$0x75316420]
        %v441 = vld.sshfl [vmem:[#allocation1 + $0x10] sm:$0xff pattern:$0x75316420]
        %v442 = vld.sshfl [vmem:[#allocation1 + $0x18] sm:$0xff pattern:$0x75316420]
        %443 = vrot.lane.b32.xlu0 %v439, 110
        %v444 = vpop.permute.xlu0 %443
        %445 = vrot.lane.b32.xlu0 %v440, 110
        %v446 = vpop.permute.xlu0 %445
        %447 = vrot.lane.b32.xlu0 %v441, 110
        %v448 = vpop.permute.xlu0 %447
        %449 = vrot.lane.b32.xlu0 %v442, 110
        %v450 = vpop.permute.xlu0 %449
        %vm451 = vcmask 900096
        %v452 = vsel %vm451, %v444, %v446
        %v453 = vsel %vm451, %v446, %v448
        %v454 = vsel %vm451, %v448, %v450
        %v456 = vsel %vm195, %v435, 0
        %v458 = vsel %vm199, %v452, 0
        %v460 = vsel %vm199, %v453, 0
        %v462 = vsel %vm199, %v454, 0
        %464 = vmatpush.msra.mxu0 0.0
        %465 = vmatpush.msra.mxu0 0.0
        %466 = vmatpush.msra.mxu0 0.0
        %467 = vmatpush.msra.mxu0 0.0
        %468 = vmatpush.msra.mxu0 0.0
        %469 = vmatpush.msra.mxu0 0.0
        %470 = vmatpush.msra.mxu0 0.0
        %471 = vmatpush.msra.mxu0 0.0
        %472 = vmatpush.msra.mxu0 0.0
        %473 = vmatpush.msra.mxu0 0.0
        %474 = vmatpush.msra.mxu0 0.0
        %475 = vmatpush.msra.mxu0 0.0
        %476 = vmatpush.msra.mxu0 0.0
        %477 = vmatpush.msra.mxu0 0.0
        %478 = vmatpush.msra.mxu0 0.0
        %479 = vmatpush.msra.mxu0 %v458
        %480 = vmatmul.f32.gmra.mxu0 %v456
        %v481 = vpop.f32.mrf.mxu0
        %v482 = vadd.f32 0.0, %v481
        %483 = vdwg.mxu0
        %484 = vmatpush.msra.mxu0 0.0
        %485 = vmatpush.msra.mxu0 0.0
        %486 = vmatpush.msra.mxu0 0.0
        %487 = vmatpush.msra.mxu0 0.0
        %488 = vmatpush.msra.mxu0 0.0
        %489 = vmatpush.msra.mxu0 0.0
        %490 = vmatpush.msra.mxu0 0.0
        %491 = vmatpush.msra.mxu0 0.0
        %492 = vmatpush.msra.mxu0 0.0
        %493 = vmatpush.msra.mxu0 0.0
        %494 = vmatpush.msra.mxu0 0.0
        %495 = vmatpush.msra.mxu0 0.0
        %496 = vmatpush.msra.mxu0 0.0
        %497 = vmatpush.msra.mxu0 0.0
        %498 = vmatpush.msra.mxu0 0.0
        %499 = vmatpush.msra.mxu0 %v460
        %500 = vmatmul.f32.gmra.mxu0 %v456
        %v501 = vpop.f32.mrf.mxu0
        %v502 = vadd.f32 0.0, %v501
        %503 = vdwg.mxu0
        %504 = vmatpush.msra.mxu0 0.0
        %505 = vmatpush.msra.mxu0 0.0
        %506 = vmatpush.msra.mxu0 0.0
        %507 = vmatpush.msra.mxu0 0.0
        %508 = vmatpush.msra.mxu0 0.0
        %509 = vmatpush.msra.mxu0 0.0
        %510 = vmatpush.msra.mxu0 0.0
        %511 = vmatpush.msra.mxu0 0.0
        %512 = vmatpush.msra.mxu0 0.0
        %513 = vmatpush.msra.mxu0 0.0
        %514 = vmatpush.msra.mxu0 0.0
        %515 = vmatpush.msra.mxu0 0.0
        %516 = vmatpush.msra.mxu0 0.0
        %517 = vmatpush.msra.mxu0 0.0
        %518 = vmatpush.msra.mxu0 0.0
        %519 = vmatpush.msra.mxu0 %v462
        %520 = vmatmul.f32.gmra.mxu0 %v456
        %v521 = vpop.f32.mrf.mxu0
        %v522 = vadd.f32 0.0, %v521
        %523 = vdwg.mxu0
        %v524 = vadd.f32 %v431, %v482
        %v525 = vadd.f32 %v432, %v502
        %v526 = vadd.f32 %v433, %v522
        %s527 = scalar_lea.vmem %s1, 16
        %v528 = vld [vmem:[%s527] sm:$0xf]
        %529 = vst [vmem:[#allocation1] ss:$2 sm:$0xff] %v169
        %s530 = scalar_lea.vmem [#allocation1], 16
        %531 = vst [vmem:[%s530] ss:$2 sm:$0xff] %v170
        %v532 = vld.sshfl [vmem:[#allocation1] sm:$0xff pattern:$0x75316420]
        %v533 = vld.sshfl [vmem:[#allocation1 + $0x8] sm:$0xff pattern:$0x75316420]
        %v534 = vld.sshfl [vmem:[#allocation1 + $0x10] sm:$0xff pattern:$0x75316420]
        %v535 = vld.sshfl [vmem:[#allocation1 + $0x18] sm:$0xff pattern:$0x75316420]
        %536 = vrot.lane.b32.xlu0 %v532, 109
        %v537 = vpop.permute.xlu0 %536
        %538 = vrot.lane.b32.xlu0 %v533, 109
        %v539 = vpop.permute.xlu0 %538
        %540 = vrot.lane.b32.xlu0 %v534, 109
        %v541 = vpop.permute.xlu0 %540
        %542 = vrot.lane.b32.xlu0 %v535, 109
        %v543 = vpop.permute.xlu0 %542
        %vm544 = vcmask 891904
        %v545 = vsel %vm544, %v537, %v539
        %v546 = vsel %vm544, %v539, %v541
        %v547 = vsel %vm544, %v541, %v543
        %v549 = vsel %vm195, %v528, 0
        %v551 = vsel %vm199, %v545, 0
        %v553 = vsel %vm199, %v546, 0
        %v555 = vsel %vm199, %v547, 0
        %557 = vmatpush.msra.mxu0 0.0
        %558 = vmatpush.msra.mxu0 0.0
        %559 = vmatpush.msra.mxu0 0.0
        %560 = vmatpush.msra.mxu0 0.0
        %561 = vmatpush.msra.mxu0 0.0
        %562 = vmatpush.msra.mxu0 0.0
        %563 = vmatpush.msra.mxu0 0.0
        %564 = vmatpush.msra.mxu0 0.0
        %565 = vmatpush.msra.mxu0 0.0
        %566 = vmatpush.msra.mxu0 0.0
        %567 = vmatpush.msra.mxu0 0.0
        %568 = vmatpush.msra.mxu0 0.0
        %569 = vmatpush.msra.mxu0 0.0
        %570 = vmatpush.msra.mxu0 0.0
        %571 = vmatpush.msra.mxu0 0.0
        %572 = vmatpush.msra.mxu0 %v551
        %573 = vmatmul.f32.gmra.mxu0 %v549
        %v574 = vpop.f32.mrf.mxu0
        %v575 = vadd.f32 0.0, %v574
        %576 = vdwg.mxu0
        %577 = vmatpush.msra.mxu0 0.0
        %578 = vmatpush.msra.mxu0 0.0
        %579 = vmatpush.msra.mxu0 0.0
        %580 = vmatpush.msra.mxu0 0.0
        %581 = vmatpush.msra.mxu0 0.0
        %582 = vmatpush.msra.mxu0 0.0
        %583 = vmatpush.msra.mxu0 0.0
        %584 = vmatpush.msra.mxu0 0.0
        %585 = vmatpush.msra.mxu0 0.0
        %586 = vmatpush.msra.mxu0 0.0
        %587 = vmatpush.msra.mxu0 0.0
        %588 = vmatpush.msra.mxu0 0.0
        %589 = vmatpush.msra.mxu0 0.0
        %590 = vmatpush.msra.mxu0 0.0
        %591 = vmatpush.msra.mxu0 0.0
        %592 = vmatpush.msra.mxu0 %v553
        %593 = vmatmul.f32.gmra.mxu0 %v549
        %v594 = vpop.f32.mrf.mxu0
        %v595 = vadd.f32 0.0, %v594
        %596 = vdwg.mxu0
        %597 = vmatpush.msra.mxu0 0.0
        %598 = vmatpush.msra.mxu0 0.0
        %599 = vmatpush.msra.mxu0 0.0
        %600 = vmatpush.msra.mxu0 0.0
        %601 = vmatpush.msra.mxu0 0.0
        %602 = vmatpush.msra.mxu0 0.0
        %603 = vmatpush.msra.mxu0 0.0
        %604 = vmatpush.msra.mxu0 0.0
        %605 = vmatpush.msra.mxu0 0.0
        %606 = vmatpush.msra.mxu0 0.0
        %607 = vmatpush.msra.mxu0 0.0
        %608 = vmatpush.msra.mxu0 0.0
        %609 = vmatpush.msra.mxu0 0.0
        %610 = vmatpush.msra.mxu0 0.0
        %611 = vmatpush.msra.mxu0 0.0
        %612 = vmatpush.msra.mxu0 %v555
        %613 = vmatmul.f32.gmra.mxu0 %v549
        %v614 = vpop.f32.mrf.mxu0
        %v615 = vadd.f32 0.0, %v614
        %616 = vdwg.mxu0
        %v617 = vadd.f32 %v524, %v575
        %v618 = vadd.f32 %v525, %v595
        %v619 = vadd.f32 %v526, %v615
        %s620 = scalar_lea.vmem %s1, 20
        %v621 = vld [vmem:[%s620] sm:$0xf]
        %622 = vst [vmem:[#allocation1] ss:$2 sm:$0xff] %v169
        %s623 = scalar_lea.vmem [#allocation1], 16
        %624 = vst [vmem:[%s623] ss:$2 sm:$0xff] %v170
        %v625 = vld.sshfl [vmem:[#allocation1] sm:$0xff pattern:$0x75316420]
        %v626 = vld.sshfl [vmem:[#allocation1 + $0x8] sm:$0xff pattern:$0x75316420]
        %v627 = vld.sshfl [vmem:[#allocation1 + $0x10] sm:$0xff pattern:$0x75316420]
        %v628 = vld.sshfl [vmem:[#allocation1 + $0x18] sm:$0xff pattern:$0x75316420]
        %629 = vrot.lane.b32.xlu0 %v625, 108
        %v630 = vpop.permute.xlu0 %629
        %631 = vrot.lane.b32.xlu0 %v626, 108
        %v632 = vpop.permute.xlu0 %631
        %633 = vrot.lane.b32.xlu0 %v627, 108
        %v634 = vpop.permute.xlu0 %633
        %635 = vrot.lane.b32.xlu0 %v628, 108
        %v636 = vpop.permute.xlu0 %635
        %vm637 = vcmask 883712
        %v638 = vsel %vm637, %v630, %v632
        %v639 = vsel %vm637, %v632, %v634
        %v640 = vsel %vm637, %v634, %v636
        %v642 = vsel %vm195, %v621, 0
        %v644 = vsel %vm199, %v638, 0
        %v646 = vsel %vm199, %v639, 0
        %v648 = vsel %vm199, %v640, 0
        %650 = vmatpush.msra.mxu0 0.0
        %651 = vmatpush.msra.mxu0 0.0
        %652 = vmatpush.msra.mxu0 0.0
        %653 = vmatpush.msra.mxu0 0.0
        %654 = vmatpush.msra.mxu0 0.0
        %655 = vmatpush.msra.mxu0 0.0
        %656 = vmatpush.msra.mxu0 0.0
        %657 = vmatpush.msra.mxu0 0.0
        %658 = vmatpush.msra.mxu0 0.0
        %659 = vmatpush.msra.mxu0 0.0
        %660 = vmatpush.msra.mxu0 0.0
        %661 = vmatpush.msra.mxu0 0.0
        %662 = vmatpush.msra.mxu0 0.0
        %663 = vmatpush.msra.mxu0 0.0
        %664 = vmatpush.msra.mxu0 0.0
        %665 = vmatpush.msra.mxu0 %v644
        %666 = vmatmul.f32.gmra.mxu0 %v642
        %v667 = vpop.f32.mrf.mxu0
        %v668 = vadd.f32 0.0, %v667
        %669 = vdwg.mxu0
        %670 = vmatpush.msra.mxu0 0.0
        %671 = vmatpush.msra.mxu0 0.0
        %672 = vmatpush.msra.mxu0 0.0
        %673 = vmatpush.msra.mxu0 0.0
        %674 = vmatpush.msra.mxu0 0.0
        %675 = vmatpush.msra.mxu0 0.0
        %676 = vmatpush.msra.mxu0 0.0
        %677 = vmatpush.msra.mxu0 0.0
        %678 = vmatpush.msra.mxu0 0.0
        %679 = vmatpush.msra.mxu0 0.0
        %680 = vmatpush.msra.mxu0 0.0
        %681 = vmatpush.msra.mxu0 0.0
        %682 = vmatpush.msra.mxu0 0.0
        %683 = vmatpush.msra.mxu0 0.0
        %684 = vmatpush.msra.mxu0 0.0
        %685 = vmatpush.msra.mxu0 %v646
        %686 = vmatmul.f32.gmra.mxu0 %v642
        %v687 = vpop.f32.mrf.mxu0
        %v688 = vadd.f32 0.0, %v687
        %689 = vdwg.mxu0
        %690 = vmatpush.msra.mxu0 0.0
        %691 = vmatpush.msra.mxu0 0.0
        %692 = vmatpush.msra.mxu0 0.0
        %693 = vmatpush.msra.mxu0 0.0
        %694 = vmatpush.msra.mxu0 0.0
        %695 = vmatpush.msra.mxu0 0.0
        %696 = vmatpush.msra.mxu0 0.0
        %697 = vmatpush.msra.mxu0 0.0
        %698 = vmatpush.msra.mxu0 0.0
        %699 = vmatpush.msra.mxu0 0.0
        %700 = vmatpush.msra.mxu0 0.0
        %701 = vmatpush.msra.mxu0 0.0
        %702 = vmatpush.msra.mxu0 0.0
        %703 = vmatpush.msra.mxu0 0.0
        %704 = vmatpush.msra.mxu0 0.0
        %705 = vmatpush.msra.mxu0 %v648
        %706 = vmatmul.f32.gmra.mxu0 %v642
        %v707 = vpop.f32.mrf.mxu0
        %v708 = vadd.f32 0.0, %v707
        %709 = vdwg.mxu0
        %v710 = vadd.f32 %v617, %v668
        %v711 = vadd.f32 %v618, %v688
        %v712 = vadd.f32 %v619, %v708
        %s713 = scalar_lea.vmem %s1, 24
        %v714 = vld [vmem:[%s713] sm:$0xf]
        %715 = vst [vmem:[#allocation1] ss:$2 sm:$0xff] %v169
        %s716 = scalar_lea.vmem [#allocation1], 16
        %717 = vst [vmem:[%s716] ss:$2 sm:$0xff] %v170
        %v718 = vld.sshfl [vmem:[#allocation1] sm:$0xff pattern:$0x75316420]
        %v719 = vld.sshfl [vmem:[#allocation1 + $0x8] sm:$0xff pattern:$0x75316420]
        %v720 = vld.sshfl [vmem:[#allocation1 + $0x10] sm:$0xff pattern:$0x75316420]
        %v721 = vld.sshfl [vmem:[#allocation1 + $0x18] sm:$0xff pattern:$0x75316420]
        %722 = vrot.lane.b32.xlu0 %v718, 92
        %v723 = vpop.permute.xlu0 %722
        %724 = vrot.lane.b32.xlu0 %v719, 92
        %v725 = vpop.permute.xlu0 %724
        %726 = vrot.lane.b32.xlu0 %v720, 92
        %v727 = vpop.permute.xlu0 %726
        %728 = vrot.lane.b32.xlu0 %v721, 92
        %v729 = vpop.permute.xlu0 %728
        %vm730 = vcmask 752640
        %v731 = vsel %vm730, %v723, %v725
        %v732 = vsel %vm730, %v725, %v727
        %v733 = vsel %vm730, %v727, %v729
        %v735 = vsel %vm195, %v714, 0
        %v737 = vsel %vm199, %v731, 0
        %v739 = vsel %vm199, %v732, 0
        %v741 = vsel %vm199, %v733, 0
        %743 = vmatpush.msra.mxu0 0.0
        %744 = vmatpush.msra.mxu0 0.0
        %745 = vmatpush.msra.mxu0 0.0
        %746 = vmatpush.msra.mxu0 0.0
        %747 = vmatpush.msra.mxu0 0.0
        %748 = vmatpush.msra.mxu0 0.0
        %749 = vmatpush.msra.mxu0 0.0
        %750 = vmatpush.msra.mxu0 0.0
        %751 = vmatpush.msra.mxu0 0.0
        %752 = vmatpush.msra.mxu0 0.0
        %753 = vmatpush.msra.mxu0 0.0
        %754 = vmatpush.msra.mxu0 0.0
        %755 = vmatpush.msra.mxu0 0.0
        %756 = vmatpush.msra.mxu0 0.0
        %757 = vmatpush.msra.mxu0 0.0
        %758 = vmatpush.msra.mxu0 %v737
        %759 = vmatmul.f32.gmra.mxu0 %v735
        %v760 = vpop.f32.mrf.mxu0
        %v761 = vadd.f32 0.0, %v760
        %762 = vdwg.mxu0
        %763 = vmatpush.msra.mxu0 0.0
        %764 = vmatpush.msra.mxu0 0.0
        %765 = vmatpush.msra.mxu0 0.0
        %766 = vmatpush.msra.mxu0 0.0
        %767 = vmatpush.msra.mxu0 0.0
        %768 = vmatpush.msra.mxu0 0.0
        %769 = vmatpush.msra.mxu0 0.0
        %770 = vmatpush.msra.mxu0 0.0
        %771 = vmatpush.msra.mxu0 0.0
        %772 = vmatpush.msra.mxu0 0.0
        %773 = vmatpush.msra.mxu0 0.0
        %774 = vmatpush.msra.mxu0 0.0
        %775 = vmatpush.msra.mxu0 0.0
        %776 = vmatpush.msra.mxu0 0.0
        %777 = vmatpush.msra.mxu0 0.0
        %778 = vmatpush.msra.mxu0 %v739
        %779 = vmatmul.f32.gmra.mxu0 %v735
        %v780 = vpop.f32.mrf.mxu0
        %v781 = vadd.f32 0.0, %v780
        %782 = vdwg.mxu0
        %783 = vmatpush.msra.mxu0 0.0
        %784 = vmatpush.msra.mxu0 0.0
        %785 = vmatpush.msra.mxu0 0.0
        %786 = vmatpush.msra.mxu0 0.0
        %787 = vmatpush.msra.mxu0 0.0
        %788 = vmatpush.msra.mxu0 0.0
        %789 = vmatpush.msra.mxu0 0.0
        %790 = vmatpush.msra.mxu0 0.0
        %791 = vmatpush.msra.mxu0 0.0
        %792 = vmatpush.msra.mxu0 0.0
        %793 = vmatpush.msra.mxu0 0.0
        %794 = vmatpush.msra.mxu0 0.0
        %795 = vmatpush.msra.mxu0 0.0
        %796 = vmatpush.msra.mxu0 0.0
        %797 = vmatpush.msra.mxu0 0.0
        %798 = vmatpush.msra.mxu0 %v741
        %799 = vmatmul.f32.gmra.mxu0 %v735
        %v800 = vpop.f32.mrf.mxu0
        %v801 = vadd.f32 0.0, %v800
        %802 = vdwg.mxu0
        %v803 = vadd.f32 %v710, %v761
        %v804 = vadd.f32 %v711, %v781
        %v805 = vadd.f32 %v712, %v801
        %s806 = scalar_lea.vmem %s1, 28
        %v807 = vld [vmem:[%s806] sm:$0xf]
        %808 = vst [vmem:[#allocation1] ss:$2 sm:$0xff] %v169
        %s809 = scalar_lea.vmem [#allocation1], 16
        %810 = vst [vmem:[%s809] ss:$2 sm:$0xff] %v170
        %v811 = vld.sshfl [vmem:[#allocation1] sm:$0xff pattern:$0x75316420]
        %v812 = vld.sshfl [vmem:[#allocation1 + $0x8] sm:$0xff pattern:$0x75316420]
        %v813 = vld.sshfl [vmem:[#allocation1 + $0x10] sm:$0xff pattern:$0x75316420]
        %v814 = vld.sshfl [vmem:[#allocation1 + $0x18] sm:$0xff pattern:$0x75316420]
        %815 = vrot.lane.b32.xlu0 %v811, 91
        %v816 = vpop.permute.xlu0 %815
        %817 = vrot.lane.b32.xlu0 %v812, 91
        %v818 = vpop.permute.xlu0 %817
        %819 = vrot.lane.b32.xlu0 %v813, 91
        %v820 = vpop.permute.xlu0 %819
        %821 = vrot.lane.b32.xlu0 %v814, 91
        %v822 = vpop.permute.xlu0 %821
        %vm823 = vcmask 744448
        %v824 = vsel %vm823, %v816, %v818
        %v825 = vsel %vm823, %v818, %v820
        %v826 = vsel %vm823, %v820, %v822
        %v828 = vsel %vm195, %v807, 0
        %v830 = vsel %vm199, %v824, 0
        %v832 = vsel %vm199, %v825, 0
        %v834 = vsel %vm199, %v826, 0
        %836 = vmatpush.msra.mxu0 0.0
        %837 = vmatpush.msra.mxu0 0.0
        %838 = vmatpush.msra.mxu0 0.0
        %839 = vmatpush.msra.mxu0 0.0
        %840 = vmatpush.msra.mxu0 0.0
        %841 = vmatpush.msra.mxu0 0.0
        %842 = vmatpush.msra.mxu0 0.0
        %843 = vmatpush.msra.mxu0 0.0
        %844 = vmatpush.msra.mxu0 0.0
        %845 = vmatpush.msra.mxu0 0.0
        %846 = vmatpush.msra.mxu0 0.0
        %847 = vmatpush.msra.mxu0 0.0
        %848 = vmatpush.msra.mxu0 0.0
        %849 = vmatpush.msra.mxu0 0.0
        %850 = vmatpush.msra.mxu0 0.0
        %851 = vmatpush.msra.mxu0 %v830
        %852 = vmatmul.f32.gmra.mxu0 %v828
        %v853 = vpop.f32.mrf.mxu0
        %v854 = vadd.f32 0.0, %v853
        %855 = vdwg.mxu0
        %856 = vmatpush.msra.mxu0 0.0
        %857 = vmatpush.msra.mxu0 0.0
        %858 = vmatpush.msra.mxu0 0.0
        %859 = vmatpush.msra.mxu0 0.0
        %860 = vmatpush.msra.mxu0 0.0
        %861 = vmatpush.msra.mxu0 0.0
        %862 = vmatpush.msra.mxu0 0.0
        %863 = vmatpush.msra.mxu0 0.0
        %864 = vmatpush.msra.mxu0 0.0
        %865 = vmatpush.msra.mxu0 0.0
        %866 = vmatpush.msra.mxu0 0.0
        %867 = vmatpush.msra.mxu0 0.0
        %868 = vmatpush.msra.mxu0 0.0
        %869 = vmatpush.msra.mxu0 0.0
        %870 = vmatpush.msra.mxu0 0.0
        %871 = vmatpush.msra.mxu0 %v832
        %872 = vmatmul.f32.gmra.mxu0 %v828
        %v873 = vpop.f32.mrf.mxu0
        %v874 = vadd.f32 0.0, %v873
        %875 = vdwg.mxu0
        %876 = vmatpush.msra.mxu0 0.0
        %877 = vmatpush.msra.mxu0 0.0
        %878 = vmatpush.msra.mxu0 0.0
        %879 = vmatpush.msra.mxu0 0.0
        %880 = vmatpush.msra.mxu0 0.0
        %881 = vmatpush.msra.mxu0 0.0
        %882 = vmatpush.msra.mxu0 0.0
        %883 = vmatpush.msra.mxu0 0.0
        %884 = vmatpush.msra.mxu0 0.0
        %885 = vmatpush.msra.mxu0 0.0
        %886 = vmatpush.msra.mxu0 0.0
        %887 = vmatpush.msra.mxu0 0.0
        %888 = vmatpush.msra.mxu0 0.0
        %889 = vmatpush.msra.mxu0 0.0
        %890 = vmatpush.msra.mxu0 0.0
        %891 = vmatpush.msra.mxu0 %v834
        %892 = vmatmul.f32.gmra.mxu0 %v828
        %v893 = vpop.f32.mrf.mxu0
        %v894 = vadd.f32 0.0, %v893
        %895 = vdwg.mxu0
        %v896 = vadd.f32 %v803, %v854
        %v897 = vadd.f32 %v804, %v874
        %v898 = vadd.f32 %v805, %v894
        %s899 = scalar_lea.vmem %s1, 32
        %v900 = vld [vmem:[%s899] sm:$0xf]
        %901 = vst [vmem:[#allocation1] ss:$2 sm:$0xff] %v169
        %s902 = scalar_lea.vmem [#allocation1], 16
        %903 = vst [vmem:[%s902] ss:$2 sm:$0xff] %v170
        %v904 = vld.sshfl [vmem:[#allocation1] sm:$0xff pattern:$0x75316420]
        %v905 = vld.sshfl [vmem:[#allocation1 + $0x8] sm:$0xff pattern:$0x75316420]
        %v906 = vld.sshfl [vmem:[#allocation1 + $0x10] sm:$0xff pattern:$0x75316420]
        %v907 = vld.sshfl [vmem:[#allocation1 + $0x18] sm:$0xff pattern:$0x75316420]
        %908 = vrot.lane.b32.xlu0 %v904, 90
        %v909 = vpop.permute.xlu0 %908
        %910 = vrot.lane.b32.xlu0 %v905, 90
        %v911 = vpop.permute.xlu0 %910
        %912 = vrot.lane.b32.xlu0 %v906, 90
        %v913 = vpop.permute.xlu0 %912
        %914 = vrot.lane.b32.xlu0 %v907, 90
        %v915 = vpop.permute.xlu0 %914
        %vm916 = vcmask 736256
        %v917 = vsel %vm916, %v909, %v911
        %v918 = vsel %vm916, %v911, %v913
        %v919 = vsel %vm916, %v913, %v915
        %v921 = vsel %vm195, %v900, 0
        %v923 = vsel %vm199, %v917, 0
        %v925 = vsel %vm199, %v918, 0
        %v927 = vsel %vm199, %v919, 0
        %929 = vmatpush.msra.mxu0 0.0
        %930 = vmatpush.msra.mxu0 0.0
        %931 = vmatpush.msra.mxu0 0.0
        %932 = vmatpush.msra.mxu0 0.0
        %933 = vmatpush.msra.mxu0 0.0
        %934 = vmatpush.msra.mxu0 0.0
        %935 = vmatpush.msra.mxu0 0.0
        %936 = vmatpush.msra.mxu0 0.0
        %937 = vmatpush.msra.mxu0 0.0
        %938 = vmatpush.msra.mxu0 0.0
        %939 = vmatpush.msra.mxu0 0.0
        %940 = vmatpush.msra.mxu0 0.0
        %941 = vmatpush.msra.mxu0 0.0
        %942 = vmatpush.msra.mxu0 0.0
        %943 = vmatpush.msra.mxu0 0.0
        %944 = vmatpush.msra.mxu0 %v923
        %945 = vmatmul.f32.gmra.mxu0 %v921
        %v946 = vpop.f32.mrf.mxu0
        %v947 = vadd.f32 0.0, %v946
        %948 = vdwg.mxu0
        %949 = vmatpush.msra.mxu0 0.0
        %950 = vmatpush.msra.mxu0 0.0
        %951 = vmatpush.msra.mxu0 0.0
        %952 = vmatpush.msra.mxu0 0.0
        %953 = vmatpush.msra.mxu0 0.0
        %954 = vmatpush.msra.mxu0 0.0
        %955 = vmatpush.msra.mxu0 0.0
        %956 = vmatpush.msra.mxu0 0.0
        %957 = vmatpush.msra.mxu0 0.0
        %958 = vmatpush.msra.mxu0 0.0
        %959 = vmatpush.msra.mxu0 0.0
        %960 = vmatpush.msra.mxu0 0.0
        %961 = vmatpush.msra.mxu0 0.0
        %962 = vmatpush.msra.mxu0 0.0
        %963 = vmatpush.msra.mxu0 0.0
        %964 = vmatpush.msra.mxu0 %v925
        %965 = vmatmul.f32.gmra.mxu0 %v921
        %v966 = vpop.f32.mrf.mxu0
        %v967 = vadd.f32 0.0, %v966
        %968 = vdwg.mxu0
        %969 = vmatpush.msra.mxu0 0.0
        %970 = vmatpush.msra.mxu0 0.0
        %971 = vmatpush.msra.mxu0 0.0
        %972 = vmatpush.msra.mxu0 0.0
        %973 = vmatpush.msra.mxu0 0.0
        %974 = vmatpush.msra.mxu0 0.0
        %975 = vmatpush.msra.mxu0 0.0
        %976 = vmatpush.msra.mxu0 0.0
        %977 = vmatpush.msra.mxu0 0.0
        %978 = vmatpush.msra.mxu0 0.0
        %979 = vmatpush.msra.mxu0 0.0
        %980 = vmatpush.msra.mxu0 0.0
        %981 = vmatpush.msra.mxu0 0.0
        %982 = vmatpush.msra.mxu0 0.0
        %983 = vmatpush.msra.mxu0 0.0
        %984 = vmatpush.msra.mxu0 %v927
        %985 = vmatmul.f32.gmra.mxu0 %v921
        %v986 = vpop.f32.mrf.mxu0
        %v987 = vadd.f32 0.0, %v986
        %988 = vdwg.mxu0
        %v989 = vadd.f32 %v896, %v947
        %v990 = vadd.f32 %v897, %v967
        %v991 = vadd.f32 %v898, %v987
        %v992 = vld [vmem:[%s2] sm:$0xf]
        %994 = vset.pattern.permute.xlu0 0
        %995 = vperm.xlu0 %994, %v992
        %v996 = vpop.permute.xlu0 %995
        %v998 = vadd.f32 %v989, %v996
        %v999 = vadd.f32 %v990, %v996
        %v1000 = vadd.f32 %v991, %v996
        %v1003 = vrot.slane %v999, 4
        %v1004 = vsel %vm199, %v998, %v1003
        %1006 = vst [vmem:[%s163] sm:$0xff] %v1004
        %1007 = vst [vmem:[%s163 + $0x8] sm:$0xf] %v1000
        %s1008 = sand.u32 %s93, 1
        %s1009 = scalar_lea.sflag [#allocation3], %s1008
        %s1010 = sand.u32 %s93, 1
        %s1011 = smul.addr %s1010, 12
        %s1012 = scalar_lea.vmem [#allocation2], %s1011
        // Predicated region
        $region33: #{tpu_custom_call.1} parent=31 // pred_check
          %p1013 = pneg %p103
        $region34: #{tpu_custom_call.1} parent=31 // pred_check_branch
          %1015 = sbr.rel (%p1013) target = $region36
        $region35: #{tpu_custom_call.1} parent=31 // pred_region
          %1017 = vsyncadd %s1009, 0
          %s1018 = smul.addr %s17, 3
          %s1019 = smul.addr %s1018, 4
          %s1020 = scalar_lea.hbm %s3, %s1019
          %s1022 = sshll.u32 %s1012, 4
          %s1023 = int_to_ptr.vmem [resolvable:$true] %s1022
          %s1024 = sshll.u32 %s1020, 4
          %s1025 = int_to_ptr.hbm [resolvable:$true] %s1024
          %1027 = dma.vmem_to_hbm [thread:$0]  %s1023, 192, %s1025, %s1009
        $region36: #{tpu_custom_call.1} parent=31 // pred_fallthru
          _
      $region32: #{tpu_custom_call.1} parent=5 // pred_fallthru
        _
      %p1028 = scmp.le.s32.totalorder 2, %s12
      // Predicated region
      $region37: #{tpu_custom_call.1} parent=5 // pred_check
        %p1029 = pneg %p1028
      $region38: #{tpu_custom_call.1} parent=5 // pred_check_branch
        %1031 = sbr.rel (%p1029) target = $region40
      $region39: #{tpu_custom_call.1} parent=5 // pred_region
        %s1032 = ssub.s32 %s12, 2
        // Predicated region
        $region41: #{tpu_custom_call.1} parent=39 // pred_check
          %p1033 = pneg %p109
        $region42: #{tpu_custom_call.1} parent=39 // pred_check_branch
          %1035 = sbr.rel (%p1033) target = $region44
        $region43: #{tpu_custom_call.1} parent=39 // pred_region
          %s1036 = sand.u32 %s94, 1
          %s1037 = scalar_lea.sflag [#allocation3], %s1036
          %s1038 = sand.u32 %s94, 1
          %s1039 = smul.addr %s1038, 12
          %s1040 = scalar_lea.vmem [#allocation2], %s1039
          %1042 = dma.done %s1037, 192
        $region44: #{tpu_custom_call.1} parent=39 // pred_fallthru
          _
      $region40: #{tpu_custom_call.1} parent=5 // pred_fallthru
        _
    $region6: #{tpu_custom_call.1} parent=1 // loop_footer
      %s16 = sadd.s32 1, %s12
    $region7: #{tpu_custom_call.1} parent=1 // loop_footer_branch
      %11 = sbr.rel target = $region3
    $region8: #{tpu_custom_call.1} parent=1 // loop_exit
      _
    %1043 = vsyncpa [#allocation3], 1
    %s1044 = scalar_lea.sflag [#allocation3], 1
    %1045 = vsyncpa %s1044, 1

</llo_original>
